<compile_context>
chip_gen: v7x
topology: tpu7x:2x2x1
jax: 0.10.0
libtpu: 0.0.40
codegen_flags: <defaults>
</compile_context>

<pallas_src>
import jax
import jax.numpy as jnp
from jax import lax
from jax.experimental import pallas as pl
from jax.experimental.pallas import tpu as pltpu


def _round_up(x, m):
    return (x + m - 1) // m * m


def _pack_weights(weight, cout, npad, dtype):
    """Pack ConvTranspose2d weight (Cin, Cout, 3, 3) into 4 tap matrices
    (Cin, npad).  Tap (di, dj) multiplies padded-input pixel xp[m+di, n+dj];
    its columns hold, for output phase p = 2*ph + pw, the kernel slice
    W[:, :, kh, kw] with kh = ph - 2*di + 2, kw = pw - 2*dj + 2 (zero where
    the phase does not use that tap)."""
    cin = weight.shape[0]
    taps = []
    for di in (0, 1):
        for dj in (0, 1):
            w_tap = jnp.zeros((cin, npad), jnp.float32)
            for ph in (0, 1):
                kh = ph - 2 * di + 2
                if not 0 <= kh <= 2:
                    continue
                for pw in (0, 1):
                    kw = pw - 2 * dj + 2
                    if not 0 <= kw <= 2:
                        continue
                    p = 2 * ph + pw
                    w_tap = w_tap.at[:, p * cout:(p + 1) * cout].set(
                        weight[:, :, kh, kw].astype(jnp.float32))
            taps.append(w_tap)
    return jnp.stack(taps, axis=0).astype(dtype)          # (4, Cin, npad)


def _make_kernel(tm, wc_pad, cin, npad):
    """Kernel for one (batch, row-tile) grid point; geometry is static."""

    def kernel(w_ref, b_ref, x_ref, xh_ref, o_ref):
        x_main = x_ref[0]            # (tm, wp, cin): padded rows [t*tm, t*tm+tm)
        x_halo = xh_ref[0]           # (1,  wp, cin): padded row    t*tm+tm
        # Row-shifted views: di=0 -> xp[m, :], di=1 -> xp[m+1, :] (uses halo).
        row_views = (x_main,
                     jnp.concatenate([x_main[1:], x_halo], axis=0))

        m = tm * wc_pad
        acc = jnp.zeros((m, npad), jnp.float32)
        for di in (0, 1):
            for dj in (0, 1):
                v = row_views[di][:, dj:dj + wc_pad, :].reshape(m, cin)
                acc = acc + jnp.dot(v, w_ref[2 * di + dj],
                                    preferred_element_type=jnp.float32)

        acc = acc + b_ref[...]                         # (1, npad) f32 broadcast
        o_ref[0] = acc.reshape(tm, wc_pad, npad).astype(o_ref.dtype)

    return kernel


def transition_up(x_nchw, skip_nchw, weight, bias):
    """x_nchw: (N, Cin, H, W); skip_nchw: (N, Cskip, Hs, Ws)
    weight:   (Cin, Cout, 3, 3)  -- PyTorch ConvTranspose2d layout
    bias:     (Cout,)
    returns:  (N, Cout + Cskip, Hs, Ws), matching the PyTorch module."""
    n, cin, h, w = x_nchw.shape
    _, cskip, hs, ws = skip_nchw.shape
    cout = weight.shape[1]

    hf, wf = 2 * h + 1, 2 * w + 1              # full transposed-conv output
    if not (1 <= hs <= hf and 1 <= ws <= wf):
        raise ValueError("skip spatial size must be in [1, 2*H+1] x [1, 2*W+1]")
    off_h, off_w = (hf - hs) // 2, (wf - ws) // 2

    cdtype = x_nchw.dtype
    itemsize = jnp.dtype(cdtype).itemsize
    sub = max(8, 32 // itemsize)               # sublane pack: 8 f32 / 16 bf16
    lane = 128

    hc, wc = h + 1, w + 1                      # coarse (pre pixel-shuffle) grid
    wc_pad = _round_up(wc, sub)
    wp = wc_pad + 1
    npad = _round_up(4 * cout, lane)           # lane-dense output channels

    # ---- per-chip VMEM budget & row-tile size ----------------------------
    try:
        vmem_cap = int(pltpu.get_tpu_info().vmem_capacity_bytes)
    except Exception:                          # conservative default (v7x)
        vmem_cap = 64 * 2 ** 20
    budget = int(0.35 * vmem_cap)
    per_row = (2 * wp * cin + 2 * wc_pad * npad) * itemsize      # in/out blocks (x2 buf)
    per_row += (wp * cin + 4 * wc_pad * cin) * itemsize          # shifted views
    per_row += wc_pad * npad * (4 + itemsize)                    # f32 acc + cast
    fixed = 2 * (4 * cin * npad + npad) * itemsize + (2 << 20)
    rows_fit = (budget - fixed) // max(per_row, 1)
    tm = int(max(min(hc, 8), min(hc, 256, rows_fit)))
    num_t = -(-hc // tm)
    hc_pad = num_t * tm
    hp = hc_pad + 1

    # ---- input: NCHW -> NHWC + halo pad (one fused XLA copy pass) --------
    x_nhwc = jnp.transpose(x_nchw, (0, 2, 3, 1))
    xp = jnp.pad(x_nhwc, ((0, 0), (1, hp - 1 - h), (1, wp - 1 - w), (0, 0)))

    w_packed = _pack_weights(weight, cout, npad, cdtype)         # (4, cin, npad)
    b_packed = jnp.zeros((1, npad), jnp.float32)
    b_packed = b_packed.at[0, :4 * cout].set(
        jnp.tile(bias.astype(jnp.float32), 4))

    y = pl.pallas_call(
        _make_kernel(tm, wc_pad, cin, npad),
        out_shape=jax.ShapeDtypeStruct((n, hc_pad, wc_pad, npad), cdtype),
        grid_spec=pltpu.PrefetchScalarGridSpec(
            num_scalar_prefetch=0,
            grid=(n, num_t),
            in_specs=[
                pl.BlockSpec((4, cin, npad), lambda b, t: (0, 0, 0)),
                pl.BlockSpec((1, npad), lambda b, t: (0, 0)),
                pl.BlockSpec((1, tm, wp, cin), lambda b, t: (b, t, 0, 0)),
                # 1-row halo: block size 1 along rows -> block idx == row idx.
                pl.BlockSpec((1, 1, wp, cin),
                             lambda b, t: (b, t * tm + tm, 0, 0)),
            ],
            out_specs=pl.BlockSpec((1, tm, wc_pad, npad),
                                   lambda b, t: (b, t, 0, 0)),
        ),
        compiler_params=pltpu.CompilerParams(
            dimension_semantics=("parallel", "parallel"),
            vmem_limit_bytes=int(min(0.75 * vmem_cap, 112 * 2 ** 20))),
    )(w_packed, b_packed, xp, xp)

    # ---- pixel-shuffle + center crop + NHWC->NCHW + concat (wrapper) -----
    y = y[..., :4 * cout].reshape(n, hc_pad, wc_pad, 2, 2, cout)
    full = jnp.transpose(y, (0, 1, 3, 2, 4, 5)).reshape(
        n, 2 * hc_pad, 2 * wc_pad, cout)
    crop = full[:, off_h:off_h + hs, off_w:off_w + ws, :]
    conv_nchw = jnp.transpose(crop, (0, 3, 1, 2))
    return jnp.concatenate([conv_nchw, skip_nchw.astype(conv_nchw.dtype)],
                           axis=1)


def _reference(x_nchw, skip_nchw, weight, bias):
    """Pure-JAX reference matching nn.ConvTranspose2d + center_crop + cat."""
    _, _, hs, ws = skip_nchw.shape
    w_conv = jnp.transpose(weight[:, :, ::-1, ::-1], (1, 0, 2, 3))  # OIHW, flip
    out = lax.conv_general_dilated(
        x_nchw.astype(jnp.float32), w_conv.astype(jnp.float32),
        window_strides=(1, 1), padding=((2, 2), (2, 2)),
        lhs_dilation=(2, 2),
        dimension_numbers=("NCHW", "OIHW", "NCHW"))
    out = out + bias.reshape(1, -1, 1, 1)
    hf, wf = out.shape[2], out.shape[3]
    oh, ow = (hf - hs) // 2, (wf - ws) // 2
    out = out[:, :, oh:oh + hs, ow:ow + ws]
    return jnp.concatenate([out, skip_nchw.astype(jnp.float32)], axis=1)


if __name__ == "__main__":
    key = jax.random.PRNGKey(0)
    k_x, k_s1, k_s2, k_w, k_b = jax.random.split(key, 5)

    N, Cin, H, W = 2, 4, 8, 8
    Cout, Cskip = 8, 6

    x = jax.random.normal(k_x, (N, Cin, H, W), jnp.float32)
    weight = 0.1 * jax.random.normal(k_w, (Cin, Cout, 3, 3), jnp.float32)
    bias = 0.1 * jax.random.normal(k_b, (Cout,), jnp.float32)

    transition_up_jit = jax.jit(transition_up)

    # Case 1: even skip size -> zero crop offsets (typical decoder shapes).
    skip1 = jax.random.normal(k_s1, (N, Cskip, 16, 16), jnp.float32)
    out1 = jax.block_until_ready(transition_up_jit(x, skip1, weight, bias))
    ref1 = jax.block_until_ready(_reference(x, skip1, weight, bias))
    assert out1.shape == (N, Cout + Cskip, 16, 16), out1.shape
    err1 = float(jnp.max(jnp.abs(out1 - ref1)))
    assert jnp.allclose(out1, ref1, atol=1e-4, rtol=1e-4), err1

    # Case 2: odd skip sizes -> nonzero center-crop offsets (off_h=1, off_w=2).
    skip2 = jax.random.normal(k_s2, (N, Cskip, 15, 13), jnp.float32)
    out2 = jax.block_until_ready(transition_up_jit(x, skip2, weight, bias))
    ref2 = jax.block_until_ready(_reference(x, skip2, weight, bias))
    assert out2.shape == (N, Cout + Cskip, 15, 13), out2.shape
    err2 = float(jnp.max(jnp.abs(out2 - ref2)))
    assert jnp.allclose(out2, ref2, atol=1e-4, rtol=1e-4), err2

    print("KERNEL_OK")
</pallas_src>

<mosaic_0001>
module attributes {stable_mosaic.version = 11 : i64} {
  func.func @kernel(%arg0: i32, %arg1: i32, %arg2: memref<4x4x128xf32, #tpu.memory_space<vmem>>, %arg3: memref<1x128xf32, #tpu.memory_space<vmem>>, %arg4: memref<1x9x17x4xf32, #tpu.memory_space<vmem>>, %arg5: memref<1x1x17x4xf32, #tpu.memory_space<vmem>>, %arg6: memref<1x9x16x128xf32, #tpu.memory_space<vmem>>) attributes {dimension_semantics = [#tpu.dimension_semantics<parallel>, #tpu.dimension_semantics<parallel>], iteration_bounds = array<i64: 2, 1>, scalar_prefetch = 0 : i64, scratch_operands = 0 : i64, tpu.core_type = #tpu.core_type<tc>, window_params = [{pipeline_mode = #tpu.pipeline_mode<synchronous>, transform_indices = @transform_0, window_bounds = array<i64: 4, 4, 128>}, {pipeline_mode = #tpu.pipeline_mode<synchronous>, transform_indices = @transform_1, window_bounds = array<i64: 1, 128>}, {transform_indices = @transform_2, window_bounds = array<i64: 1, 9, 17, 4>}, {transform_indices = @transform_3, window_bounds = array<i64: 1, 1, 17, 4>}, {transform_indices = @transform_4, window_bounds = array<i64: 1, 9, 16, 128>}]} {
    %c0 = arith.constant 0 : index
    %c0_0 = arith.constant 0 : index
    %c0_1 = arith.constant 0 : index
    %c0_2 = arith.constant 0 : index
    %0 = vector.load %arg4[%c0, %c0_0, %c0_1, %c0_2] : memref<1x9x17x4xf32, #tpu.memory_space<vmem>>, vector<1x9x17x4xf32>
    %1 = vector.shape_cast %0 : vector<1x9x17x4xf32> to vector<9x17x4xf32>
    %c0_3 = arith.constant 0 : index
    %c0_4 = arith.constant 0 : index
    %c0_5 = arith.constant 0 : index
    %c0_6 = arith.constant 0 : index
    %2 = vector.load %arg5[%c0_3, %c0_4, %c0_5, %c0_6] : memref<1x1x17x4xf32, #tpu.memory_space<vmem>>, vector<1x1x17x4xf32>
    %3 = vector.shape_cast %2 : vector<1x1x17x4xf32> to vector<1x17x4xf32>
    %4 = vector.extract_strided_slice %1 {offsets = [1, 0, 0], sizes = [8, 17, 4], strides = [1, 1, 1]} : vector<9x17x4xf32> to vector<8x17x4xf32>
    %5 = tpu.concatenate %4, %3 in 0 : vector<8x17x4xf32>, vector<1x17x4xf32> -> vector<9x17x4xf32>
    %cst = arith.constant 0.000000e+00 : f32
    %6 = vector.broadcast %cst : f32 to vector<144x128xf32>
    %7 = vector.extract_strided_slice %1 {offsets = [0, 0, 0], sizes = [9, 16, 4], strides = [1, 1, 1]} : vector<9x17x4xf32> to vector<9x16x4xf32>
    %8 = vector.shape_cast %7 : vector<9x16x4xf32> to vector<144x4xf32>
    %c0_7 = arith.constant 0 : index
    %c0_8 = arith.constant 0 : index
    %c0_9 = arith.constant 0 : index
    %9 = vector.load %arg2[%c0_7, %c0_8, %c0_9] : memref<4x4x128xf32, #tpu.memory_space<vmem>>, vector<1x4x128xf32>
    %10 = vector.shape_cast %9 : vector<1x4x128xf32> to vector<4x128xf32>
    %cst_10 = arith.constant dense<0.000000e+00> : vector<144x128xf32>
    %11 = tpu.matmul %8, %10, %cst_10 {dimension_numbers = #tpu.dot_dimension_numbers<[1], [0], [0], [1], [0, 0, 1, 1], [], []>} : vector<144x4xf32>, vector<4x128xf32>, vector<144x128xf32> -> vector<144x128xf32>
    %12 = arith.addf %6, %11 : vector<144x128xf32>
    %13 = vector.extract_strided_slice %1 {offsets = [0, 1, 0], sizes = [9, 16, 4], strides = [1, 1, 1]} : vector<9x17x4xf32> to vector<9x16x4xf32>
    %14 = vector.shape_cast %13 : vector<9x16x4xf32> to vector<144x4xf32>
    %c1 = arith.constant 1 : index
    %c0_11 = arith.constant 0 : index
    %c0_12 = arith.constant 0 : index
    %15 = vector.load %arg2[%c1, %c0_11, %c0_12] : memref<4x4x128xf32, #tpu.memory_space<vmem>>, vector<1x4x128xf32>
    %16 = vector.shape_cast %15 : vector<1x4x128xf32> to vector<4x128xf32>
    %cst_13 = arith.constant dense<0.000000e+00> : vector<144x128xf32>
    %17 = tpu.matmul %14, %16, %cst_13 {dimension_numbers = #tpu.dot_dimension_numbers<[1], [0], [0], [1], [0, 0, 1, 1], [], []>} : vector<144x4xf32>, vector<4x128xf32>, vector<144x128xf32> -> vector<144x128xf32>
    %18 = arith.addf %12, %17 : vector<144x128xf32>
    %19 = vector.extract_strided_slice %5 {offsets = [0, 0, 0], sizes = [9, 16, 4], strides = [1, 1, 1]} : vector<9x17x4xf32> to vector<9x16x4xf32>
    %20 = vector.shape_cast %19 : vector<9x16x4xf32> to vector<144x4xf32>
    %c2 = arith.constant 2 : index
    %c0_14 = arith.constant 0 : index
    %c0_15 = arith.constant 0 : index
    %21 = vector.load %arg2[%c2, %c0_14, %c0_15] : memref<4x4x128xf32, #tpu.memory_space<vmem>>, vector<1x4x128xf32>
    %22 = vector.shape_cast %21 : vector<1x4x128xf32> to vector<4x128xf32>
    %cst_16 = arith.constant dense<0.000000e+00> : vector<144x128xf32>
    %23 = tpu.matmul %20, %22, %cst_16 {dimension_numbers = #tpu.dot_dimension_numbers<[1], [0], [0], [1], [0, 0, 1, 1], [], []>} : vector<144x4xf32>, vector<4x128xf32>, vector<144x128xf32> -> vector<144x128xf32>
    %24 = arith.addf %18, %23 : vector<144x128xf32>
    %25 = vector.extract_strided_slice %5 {offsets = [0, 1, 0], sizes = [9, 16, 4], strides = [1, 1, 1]} : vector<9x17x4xf32> to vector<9x16x4xf32>
    %26 = vector.shape_cast %25 : vector<9x16x4xf32> to vector<144x4xf32>
    %c3 = arith.constant 3 : index
    %c0_17 = arith.constant 0 : index
    %c0_18 = arith.constant 0 : index
    %27 = vector.load %arg2[%c3, %c0_17, %c0_18] : memref<4x4x128xf32, #tpu.memory_space<vmem>>, vector<1x4x128xf32>
    %28 = vector.shape_cast %27 : vector<1x4x128xf32> to vector<4x128xf32>
    %cst_19 = arith.constant dense<0.000000e+00> : vector<144x128xf32>
    %29 = tpu.matmul %26, %28, %cst_19 {dimension_numbers = #tpu.dot_dimension_numbers<[1], [0], [0], [1], [0, 0, 1, 1], [], []>} : vector<144x4xf32>, vector<4x128xf32>, vector<144x128xf32> -> vector<144x128xf32>
    %30 = arith.addf %24, %29 : vector<144x128xf32>
    %c0_20 = arith.constant 0 : index
    %c0_21 = arith.constant 0 : index
    %31 = vector.load %arg3[%c0_20, %c0_21] : memref<1x128xf32, #tpu.memory_space<vmem>>, vector<1x128xf32>
    %32 = vector.broadcast %31 : vector<1x128xf32> to vector<144x128xf32>
    %33 = arith.addf %30, %32 : vector<144x128xf32>
    %34 = vector.shape_cast %33 : vector<144x128xf32> to vector<9x16x128xf32>
    %c0_22 = arith.constant 0 : index
    %c0_23 = arith.constant 0 : index
    %c0_24 = arith.constant 0 : index
    %c0_25 = arith.constant 0 : index
    %35 = vector.load %arg6[%c0_22, %c0_23, %c0_24, %c0_25] : memref<1x9x16x128xf32, #tpu.memory_space<vmem>>, vector<1x9x16x128xf32>
    %36 = vector.shape_cast %35 : vector<1x9x16x128xf32> to vector<9x16x128xf32>
    %37 = vector.shape_cast %34 : vector<9x16x128xf32> to vector<1x9x16x128xf32>
    tpu.vector_store %arg6[%c0_22, %c0_23, %c0_24, %c0_25], %37 {strides = array<i32>} : memref<1x9x16x128xf32, #tpu.memory_space<vmem>>, vector<1x9x16x128xf32>,
    return
  }
  func.func @transform_0(%arg0: i32, %arg1: i32) -> (i32, i32, i32) {
    %c0_i32 = arith.constant 0 : i32
    %c0_i32_0 = arith.constant 0 : i32
    %c0_i32_1 = arith.constant 0 : i32
    %c0_i32_2 = arith.constant 0 : i32
    return %c0_i32, %c0_i32_0, %c0_i32_1 : i32, i32, i32
  }
  func.func @transform_1(%arg0: i32, %arg1: i32) -> (i32, i32) {
    %c0_i32 = arith.constant 0 : i32
    %c0_i32_0 = arith.constant 0 : i32
    %c0_i32_1 = arith.constant 0 : i32
    return %c0_i32, %c0_i32_0 : i32, i32
  }
  func.func @transform_2(%arg0: i32, %arg1: i32) -> (i32, i32, i32, i32) {
    %c0_i32 = arith.constant 0 : i32
    %c0_i32_0 = arith.constant 0 : i32
    %c0_i32_1 = arith.constant 0 : i32
    return %arg0, %arg1, %c0_i32, %c0_i32_0 : i32, i32, i32, i32
  }
  func.func @transform_3(%arg0: i32, %arg1: i32) -> (i32, i32, i32, i32) {
    %c9_i32 = arith.constant 9 : i32
    %0 = arith.muli %arg1, %c9_i32 : i32
    %c9_i32_0 = arith.constant 9 : i32
    %1 = arith.addi %0, %c9_i32_0 : i32
    %c0_i32 = arith.constant 0 : i32
    %c0_i32_1 = arith.constant 0 : i32
    %c0_i32_2 = arith.constant 0 : i32
    return %arg0, %1, %c0_i32, %c0_i32_1 : i32, i32, i32, i32
  }
  func.func @transform_4(%arg0: i32, %arg1: i32) -> (i32, i32, i32, i32) {
    %c0_i32 = arith.constant 0 : i32
    %c0_i32_0 = arith.constant 0 : i32
    %c0_i32_1 = arith.constant 0 : i32
    return %arg0, %arg1, %c0_i32, %c0_i32_0 : i32, i32, i32, i32
  }
}

</mosaic_0001>

<llo_original>
// kernel: transition_up.1
$region0: #{transition_up.1}
  #allocation0 [shape = 'u32[]', space=smem, size = 0x4, offset = 0x4, fixed_abs, tag = 'smem constant byte address 0x4 - core index']
  #allocation1 [shape = 'u32[144,128]{1,0:T(1,128)}', space=vmem, size = 0x12000, scoped, tag = 'internal scratch']
  %s0 = inlined_call_operand.vmem [shape: f32[4,4,128], index: 0, kind: input, shape index: {}]
  %s1 = inlined_call_operand.vmem [shape: f32[1,128], index: 1, kind: input, shape index: {}]
  %s2 = inlined_call_operand.vmem [shape: f32[2,10,17,4], index: 2, kind: input, shape index: {}, may-alias: {2,3}]
  %s3 = inlined_call_operand.vmem [shape: f32[2,10,17,4], index: 3, kind: input, shape index: {}, may-alias: {2,3}]
  %s4 = inlined_call_operand.vmem [shape: f32[2,9,16,128], index: 4, kind: output, shape index: {}]
  %s5 = sld [smem:[#allocation0]]
  $region49: #{transition_up.1} parent=0
    _
  %s7 = ssub.s32 1, %s5
  %s8 = scalar_select 0, %s7, %s5
  loop: start=0, step=1, limit=4
  $region2: #{transition_up.1} parent=0 // loop_pre_header
    _
  $region3: #{transition_up.1} parent=0 // loop_header
    %s10 = sphi 0, %s14
    %p11 = scmp.ge.s32.totalorder %s10, 4
    %s17 = sphi 0, %s29
    %s18 = sphi 0, %s25
    %s19 = sphi 0, %s17
    %s20 = sphi 0, %s18
    %s21 = sphi 0, %s19
    %s22 = sphi 0, %s20
    %s30 = sphi 0, %s30
    %s32 = sphi 0, %s30
    %s33 = sphi 0, %s32
    %s47 = sphi 0, %s33
    %s51 = sphi 0, %s51
    %s53 = sphi 0, %s51
    %s54 = sphi 0, %s53
    %s68 = sphi 0, %s54
    %s76 = sphi 0, %s78
    %s79 = sphi 0, %s76
    %s80 = sphi 0, %s79
    %s96 = sphi 0, %s80
    %s108 = sphi 0, %s110
    %s111 = sphi 0, %s108
    %s112 = sphi 0, %s111
    %s128 = sphi 0, %s112
    %s136 = sphi 0, %s138
    %s139 = sphi 0, %s136
    %s140 = sphi 0, %s139
    %s156 = sphi 0, %s140
  $region4: #{transition_up.1} parent=0 // loop_header_branch
    %13 = sbr.rel (%p11) target = $region8
  $region5: #{transition_up.1} parent=0 // loop_body
    %s15 = ssub.s32 %s10, 1
    %s16 = ssub.s32 %s10, 2
    %s23 = sadd.s32 1, %s18
    %p24 = scmp.ge.s32.totalorder %s23, 1
    %s25 = scalar_select %p24, 0, %s23
    %s26 = sadd.s32 1, %s17
    %s27 = scalar_select %p24, %s26, %s17
    %p28 = scmp.ge.s32.totalorder %s27, 2
    %s29 = scalar_select %p28, 0, %s27
    %s31 = sadd.s32 %s30, 1
    %p34 = scmp.eq.s32.totalorder %s10, 1
    %p35 = scmp.ne.s32.totalorder %s30, %s32
    %p36 = scmp.eq.s32.totalorder %s10, 0
    %p37 = por %p35, %p36
    %p38 = scmp.ne.s32.totalorder %s30, %s32
    %p39 = scmp.eq.s32.totalorder %s15, 1
    %p40 = por %p38, %p39
    %p41 = scmp.ne.s32.totalorder %s32, %s33
    %p42 = scmp.eq.s32.totalorder %s15, 0
    %p43 = por %p41, %p42
    %p44 = scmp.ne.s32.totalorder %s32, %s33
    %p45 = scmp.eq.s32.totalorder %s16, 1
    %p46 = por %p44, %p45
    %p48 = scmp.ne.s32.totalorder %s33, %s47
    %p49 = scmp.eq.s32.totalorder %s16, 0
    %p50 = por %p48, %p49
    %s52 = sadd.s32 %s51, 1
    %p55 = scmp.eq.s32.totalorder %s10, 1
    %p56 = scmp.ne.s32.totalorder %s51, %s53
    %p57 = scmp.eq.s32.totalorder %s10, 0
    %p58 = por %p56, %p57
    %p59 = scmp.ne.s32.totalorder %s51, %s53
    %p60 = scmp.eq.s32.totalorder %s15, 1
    %p61 = por %p59, %p60
    %p62 = scmp.ne.s32.totalorder %s53, %s54
    %p63 = scmp.eq.s32.totalorder %s15, 0
    %p64 = por %p62, %p63
    %p65 = scmp.ne.s32.totalorder %s53, %s54
    %p66 = scmp.eq.s32.totalorder %s16, 1
    %p67 = por %p65, %p66
    %p69 = scmp.ne.s32.totalorder %s54, %s68
    %p70 = scmp.eq.s32.totalorder %s16, 0
    %p71 = por %p69, %p70
    %s72 = ssub.s32 %s17, %s29
    %s73 = ssub.s32 %s18, %s25
    %s74 = sor.u32 %s72, %s73
    %p75 = scmp.eq.s32.totalorder %s74, 0
    %s77 = sadd.s32 %s76, 1
    %s78 = scalar_select %p75, %s76, %s77
    %p81 = pneg %p75
    %p82 = scmp.eq.s32.totalorder %s10, 1
    %p83 = por %p81, %p82
    %p84 = scmp.ne.s32.totalorder %s76, %s79
    %p85 = scmp.eq.s32.totalorder %s10, 0
    %p86 = por %p84, %p85
    %p87 = scmp.ne.s32.totalorder %s76, %s79
    %p88 = scmp.eq.s32.totalorder %s15, 1
    %p89 = por %p87, %p88
    %p90 = scmp.ne.s32.totalorder %s79, %s80
    %p91 = scmp.eq.s32.totalorder %s15, 0
    %p92 = por %p90, %p91
    %p93 = scmp.ne.s32.totalorder %s79, %s80
    %p94 = scmp.eq.s32.totalorder %s16, 1
    %p95 = por %p93, %p94
    %p97 = scmp.ne.s32.totalorder %s80, %s96
    %p98 = scmp.eq.s32.totalorder %s16, 0
    %p99 = por %p97, %p98
    %s100 = smul.u32 %s18, 9
    %s101 = sadd.s32 %s100, 9
    %s102 = smul.u32 %s25, 9
    %s103 = sadd.s32 %s102, 9
    %s104 = ssub.s32 %s17, %s29
    %s105 = ssub.s32 %s101, %s103
    %s106 = sor.u32 %s104, %s105
    %p107 = scmp.eq.s32.totalorder %s106, 0
    %s109 = sadd.s32 %s108, 1
    %s110 = scalar_select %p107, %s108, %s109
    %p113 = pneg %p107
    %p114 = scmp.eq.s32.totalorder %s10, 1
    %p115 = por %p113, %p114
    %p116 = scmp.ne.s32.totalorder %s108, %s111
    %p117 = scmp.eq.s32.totalorder %s10, 0
    %p118 = por %p116, %p117
    %p119 = scmp.ne.s32.totalorder %s108, %s111
    %p120 = scmp.eq.s32.totalorder %s15, 1
    %p121 = por %p119, %p120
    %p122 = scmp.ne.s32.totalorder %s111, %s112
    %p123 = scmp.eq.s32.totalorder %s15, 0
    %p124 = por %p122, %p123
    %p125 = scmp.ne.s32.totalorder %s111, %s112
    %p126 = scmp.eq.s32.totalorder %s16, 1
    %p127 = por %p125, %p126
    %p129 = scmp.ne.s32.totalorder %s112, %s128
    %p130 = scmp.eq.s32.totalorder %s16, 0
    %p131 = por %p129, %p130
    %s132 = ssub.s32 %s17, %s29
    %s133 = ssub.s32 %s18, %s25
    %s134 = sor.u32 %s132, %s133
    %p135 = scmp.eq.s32.totalorder %s134, 0
    %s137 = sadd.s32 %s136, 1
    %s138 = scalar_select %p135, %s136, %s137
    %p141 = pneg %p135
    %p142 = scmp.eq.s32.totalorder %s10, 1
    %p143 = por %p141, %p142
    %p144 = scmp.ne.s32.totalorder %s136, %s139
    %p145 = scmp.eq.s32.totalorder %s10, 0
    %p146 = por %p144, %p145
    %p147 = scmp.ne.s32.totalorder %s136, %s139
    %p148 = scmp.eq.s32.totalorder %s15, 1
    %p149 = por %p147, %p148
    %p150 = scmp.ne.s32.totalorder %s139, %s140
    %p151 = scmp.eq.s32.totalorder %s15, 0
    %p152 = por %p150, %p151
    %p153 = scmp.ne.s32.totalorder %s139, %s140
    %p154 = scmp.eq.s32.totalorder %s16, 1
    %p155 = por %p153, %p154
    %p157 = scmp.ne.s32.totalorder %s140, %s156
    %p158 = scmp.eq.s32.totalorder %s16, 0
    %p159 = por %p157, %p158
    %p160 = scmp.le.s32.totalorder 1, %s10
    %p161 = scmp.lt.s32.totalorder %s10, 3
    %p162 = pnand %p160, %p161
    %p163 = pneg %p162
    // Predicated region
    $region9: #{transition_up.1} parent=5 // pred_check
      _
    $region10: #{transition_up.1} parent=5 // pred_check_branch
      %165 = sbr.rel (%p162) target = $region12
    $region11: #{transition_up.1} parent=5 // pred_region
      %s166 = ssub.s32 %s10, 1
      // Predicated region
      $region13: #{transition_up.1} parent=11 // pred_check
        %p167 = pneg %p43
      $region14: #{transition_up.1} parent=11 // pred_check_branch
        %169 = sbr.rel (%p167) target = $region16
      $region15: #{transition_up.1} parent=11 // pred_region
        _
      $region16: #{transition_up.1} parent=11 // pred_fallthru
        _
      // Predicated region
      $region17: #{transition_up.1} parent=11 // pred_check
        %p170 = pneg %p64
      $region18: #{transition_up.1} parent=11 // pred_check_branch
        %172 = sbr.rel (%p170) target = $region20
      $region19: #{transition_up.1} parent=11 // pred_region
        _
      $region20: #{transition_up.1} parent=11 // pred_fallthru
        _
    $region12: #{transition_up.1} parent=5 // pred_fallthru
      _
    %p173 = scmp.lt.s32.totalorder %s10, 2
    // Predicated region
    $region21: #{transition_up.1} parent=5 // pred_check
      %p174 = pneg %p173
    $region22: #{transition_up.1} parent=5 // pred_check_branch
      %176 = sbr.rel (%p174) target = $region24
    $region23: #{transition_up.1} parent=5 // pred_region
      // Predicated region
      $region25: #{transition_up.1} parent=23 // pred_check
        %p177 = pneg %p86
      $region26: #{transition_up.1} parent=23 // pred_check_branch
        %179 = sbr.rel (%p177) target = $region28
      $region27: #{transition_up.1} parent=23 // pred_region
        %s180 = smul.u32 9, %s18
        %s181 = ssub.s32 10, %s180
        %p182 = scmp.lt.s32.totalorder %s181, 9
        %s183 = scalar_select %p182, %s181, 9
        %s184 = smul.u32 128, %s183
        %s185 = smul.u32 %s184, 3
        %p186 = scmp.lt.s32.totalorder %s17, 1
        %s187 = scalar_select %p186, %s17, 1
        %p188 = scmp.lt.s32.totalorder %s180, 9
        %s189 = scalar_select %p188, %s180, 9
        %s190 = smul.addr %s189, 3
        %s191 = smul.addr %s187, 30
        %s192 = sadd.s32 %s190, %s191
        %s193 = smul.addr %s192, 8
        %s194 = scalar_lea.vmem %s2, %s193
        %s195 = smul.u32 9, %s18
        %s196 = ssub.s32 10, %s195
        %p197 = scmp.lt.s32.totalorder %s196, 9
        %s198 = scalar_select %p197, %s196, 9
        %s199 = smul.u32 128, %s198
        %s200 = smul.u32 %s199, 3
      $region28: #{transition_up.1} parent=23 // pred_fallthru
        _
      // Predicated region
      $region29: #{transition_up.1} parent=23 // pred_check
        %p201 = pneg %p118
      $region30: #{transition_up.1} parent=23 // pred_check_branch
        %203 = sbr.rel (%p201) target = $region32
      $region31: #{transition_up.1} parent=23 // pred_region
        %s204 = smul.u32 %s18, 9
        %s205 = sadd.s32 %s204, 9
        %p206 = scmp.lt.s32.totalorder %s17, 1
        %s207 = scalar_select %p206, %s17, 1
        %p208 = scmp.lt.s32.totalorder %s205, 9
        %s209 = scalar_select %p208, %s205, 9
        %s210 = smul.addr %s209, 3
        %s211 = smul.addr %s207, 30
        %s212 = sadd.s32 %s210, %s211
        %s213 = smul.addr %s212, 8
        %s214 = scalar_lea.vmem %s3, %s213
        %s215 = smul.u32 %s18, 9
        %s216 = sadd.s32 %s215, 9
      $region32: #{transition_up.1} parent=23 // pred_fallthru
        _
    $region24: #{transition_up.1} parent=5 // pred_fallthru
      _
    %p217 = scmp.le.s32.totalorder 1, %s10
    %p218 = scmp.lt.s32.totalorder %s10, 3
    %p219 = pnand %p217, %p218
    %p220 = pneg %p219
    // Predicated region
    $region33: #{transition_up.1} parent=5 // pred_check
      _
    $region34: #{transition_up.1} parent=5 // pred_check_branch
      %222 = sbr.rel (%p219) target = $region36
    $region35: #{transition_up.1} parent=5 // pred_region
      %s223 = ssub.s32 %s10, 1
      %p224 = pneg %p43
      %p225 = pneg %p40
      %p226 = pneg %p64
      %p227 = pneg %p61
      %s228 = smul.u32 9, %s20
      %s229 = ssub.s32 10, %s228
      %p230 = scmp.lt.s32.totalorder %s229, 9
      %s231 = scalar_select %p230, %s229, 9
      %s232 = smul.u32 128, %s231
      %s233 = smul.u32 %s232, 3
      %p234 = scmp.lt.s32.totalorder %s19, 1
      %s235 = scalar_select %p234, %s19, 1
      %p236 = scmp.lt.s32.totalorder %s228, 9
      %s237 = scalar_select %p236, %s228, 9
      %s238 = smul.addr %s237, 3
      %s239 = smul.addr %s235, 30
      %s240 = sadd.s32 %s238, %s239
      %s241 = smul.addr %s240, 8
      %s242 = scalar_lea.vmem %s2, %s241
      %p243 = pneg %p92
      %p244 = pneg %p89
      %s245 = smul.u32 %s20, 9
      %s246 = sadd.s32 %s245, 9
      %p247 = scmp.lt.s32.totalorder %s19, 1
      %s248 = scalar_select %p247, %s19, 1
      %p249 = scmp.lt.s32.totalorder %s246, 9
      %s250 = scalar_select %p249, %s246, 9
      %s251 = smul.addr %s250, 3
      %s252 = smul.addr %s248, 30
      %s253 = sadd.s32 %s251, %s252
      %s254 = smul.addr %s253, 8
      %s255 = scalar_lea.vmem %s3, %s254
      %p256 = pneg %p124
      %p257 = pneg %p121
      %p258 = pneg %p152
      %p259 = pneg %p149
      %s260 = smul.u32 9, %s20
      %p261 = scmp.lt.s32.totalorder %s19, 1
      %s262 = scalar_select %p261, %s19, 1
      %p263 = scmp.lt.s32.totalorder %s260, 8
      %s264 = scalar_select %p263, %s260, 8
      %s265 = smul.addr %s264, 2
      %s266 = smul.addr %s262, 18
      %s267 = sadd.s32 %s265, %s266
      %s268 = smul.addr %s267, 8
      %s269 = scalar_lea.vmem %s4, %s268
      %s270 = smul.u32 9, %s20
      %s271 = ssub.s32 10, %s270
      %p272 = scmp.lt.s32.totalorder %s271, 9
      %s273 = scalar_select %p272, %s271, 9
      %s274 = smul.u32 128, %s273
      %s275 = smul.u32 %s274, 3
      %p276 = scmp.lt.s32.totalorder %s19, 1
      %s277 = scalar_select %p276, %s19, 1
      %p278 = scmp.lt.s32.totalorder %s270, 9
      %s279 = scalar_select %p278, %s270, 9
      %s280 = smul.addr %s279, 3
      %s281 = smul.addr %s277, 30
      %s282 = sadd.s32 %s280, %s281
      %s283 = smul.addr %s282, 8
      %s284 = scalar_lea.vmem %s2, %s283
      %s285 = smul.u32 9, %s20
      %s286 = ssub.s32 10, %s285
      %p287 = scmp.lt.s32.totalorder %s286, 9
      %s288 = scalar_select %p287, %s286, 9
      %s289 = smul.u32 128, %s288
      %s290 = smul.u32 %s289, 3
      %s291 = smul.u32 %s20, 9
      %s292 = sadd.s32 %s291, 9
      %p293 = scmp.lt.s32.totalorder %s19, 1
      %s294 = scalar_select %p293, %s19, 1
      %p295 = scmp.lt.s32.totalorder %s292, 9
      %s296 = scalar_select %p295, %s292, 9
      %s297 = smul.addr %s296, 3
      %s298 = smul.addr %s294, 30
      %s299 = sadd.s32 %s297, %s298
      %s300 = smul.addr %s299, 8
      %s301 = scalar_lea.vmem %s3, %s300
      %s302 = smul.u32 %s20, 9
      %s303 = sadd.s32 %s302, 9
      %s304 = smul.u32 9, %s20
      %p305 = scmp.lt.s32.totalorder %s19, 1
      %s306 = scalar_select %p305, %s19, 1
      %p307 = scmp.lt.s32.totalorder %s304, 8
      %s308 = scalar_select %p307, %s304, 8
      %s309 = smul.addr %s308, 2
      %s310 = smul.addr %s306, 18
      %s311 = sadd.s32 %s309, %s310
      %s312 = smul.addr %s311, 8
      %s313 = scalar_lea.vmem %s4, %s312
      %s314 = smul.u32 9, %s20
      %v315 = vld [vmem:[%s284] sm:$0xff]
      %v316 = vld [vmem:[%s284 + $0x8] sm:$0xff]
      %v317 = vld [vmem:[%s284 + $0x10] sm:$0x1]
      %v318 = vld [vmem:[%s284 + $0x18] sm:$0xff]
      %v319 = vld [vmem:[%s284 + $0x20] sm:$0xff]
      %v320 = vld [vmem:[%s284 + $0x28] sm:$0x1]
      %v321 = vld [vmem:[%s284 + $0x30] sm:$0xff]
      %v322 = vld [vmem:[%s284 + $0x38] sm:$0xff]
      %v323 = vld [vmem:[%s284 + $0x40] sm:$0x1]
      %v324 = vld [vmem:[%s284 + $0x48] sm:$0xff]
      %v325 = vld [vmem:[%s284 + $0x50] sm:$0xff]
      %v326 = vld [vmem:[%s284 + $0x58] sm:$0x1]
      %v327 = vld [vmem:[%s284 + $0x60] sm:$0xff]
      %v328 = vld [vmem:[%s284 + $0x68] sm:$0xff]
      %v329 = vld [vmem:[%s284 + $0x70] sm:$0x1]
      %v330 = vld [vmem:[%s284 + $0x78] sm:$0xff]
      %v331 = vld [vmem:[%s284 + $0x80] sm:$0xff]
      %v332 = vld [vmem:[%s284 + $0x88] sm:$0x1]
      %v333 = vld [vmem:[%s284 + $0x90] sm:$0xff]
      %v334 = vld [vmem:[%s284 + $0x98] sm:$0xff]
      %v335 = vld [vmem:[%s284 + $0xa0] sm:$0x1]
      %v336 = vld [vmem:[%s284 + $0xa8] sm:$0xff]
      %v337 = vld [vmem:[%s284 + $0xb0] sm:$0xff]
      %v338 = vld [vmem:[%s284 + $0xb8] sm:$0x1]
      %v339 = vld [vmem:[%s284 + $0xc0] sm:$0xff]
      %v340 = vld [vmem:[%s284 + $0xc8] sm:$0xff]
      %v341 = vld [vmem:[%s284 + $0xd0] sm:$0x1]
      %v342 = vld [vmem:[%s301] sm:$0xff]
      %v343 = vld [vmem:[%s301 + $0x8] sm:$0xff]
      %v344 = vld [vmem:[%s301 + $0x10] sm:$0x1]
      %v345 = vld [vmem:[%s0] sm:$0xf]
      %vm373 = vcmask 1046528
      %v374 = vrot.slane %v315, 1
      %v375 = vrot.slane %v316, 1
      %v376 = vsel %vm373, %v374, %v375
      %v377 = vrot.slane %v317, 1
      %v378 = vsel %vm373, %v375, %v377
      %v379 = vrot.slane %v318, 1
      %v380 = vrot.slane %v319, 1
      %v381 = vsel %vm373, %v379, %v380
      %v382 = vrot.slane %v320, 1
      %v383 = vsel %vm373, %v380, %v382
      %v384 = vrot.slane %v321, 1
      %v385 = vrot.slane %v322, 1
      %v386 = vsel %vm373, %v384, %v385
      %v387 = vrot.slane %v323, 1
      %v388 = vsel %vm373, %v385, %v387
      %v389 = vrot.slane %v324, 1
      %v390 = vrot.slane %v325, 1
      %v391 = vsel %vm373, %v389, %v390
      %v392 = vrot.slane %v326, 1
      %v393 = vsel %vm373, %v390, %v392
      %v394 = vrot.slane %v327, 1
      %v395 = vrot.slane %v328, 1
      %v396 = vsel %vm373, %v394, %v395
      %v397 = vrot.slane %v329, 1
      %v398 = vsel %vm373, %v395, %v397
      %v399 = vrot.slane %v330, 1
      %v400 = vrot.slane %v331, 1
      %v401 = vsel %vm373, %v399, %v400
      %v402 = vrot.slane %v332, 1
      %v403 = vsel %vm373, %v400, %v402
      %v404 = vrot.slane %v333, 1
      %v405 = vrot.slane %v334, 1
      %v406 = vsel %vm373, %v404, %v405
      %v407 = vrot.slane %v335, 1
      %v408 = vsel %vm373, %v405, %v407
      %v409 = vrot.slane %v336, 1
      %v410 = vrot.slane %v337, 1
      %v411 = vsel %vm373, %v409, %v410
      %v412 = vrot.slane %v338, 1
      %v413 = vsel %vm373, %v410, %v412
      %v414 = vrot.slane %v339, 1
      %v415 = vrot.slane %v340, 1
      %v416 = vsel %vm373, %v414, %v415
      %v417 = vrot.slane %v341, 1
      %v418 = vsel %vm373, %v415, %v417
      %s419 = scalar_lea.vmem %s0, 4
      %v420 = vld [vmem:[%s419] sm:$0xf]
      %vm421 = vcmask 31744
      %v422 = vsel %vm421, %v376, 0
      %v424 = vsel %vm421, %v378, 0
      %v426 = vsel %vm421, %v381, 0
      %v428 = vsel %vm421, %v383, 0
      %v430 = vsel %vm421, %v386, 0
      %v432 = vsel %vm421, %v388, 0
      %v434 = vsel %vm421, %v391, 0
      %v436 = vsel %vm421, %v393, 0
      %v438 = vsel %vm421, %v396, 0
      %v440 = vsel %vm421, %v398, 0
      %v442 = vsel %vm421, %v401, 0
      %v444 = vsel %vm421, %v403, 0
      %v446 = vsel %vm421, %v406, 0
      %v448 = vsel %vm421, %v408, 0
      %v450 = vsel %vm421, %v411, 0
      %v452 = vsel %vm421, %v413, 0
      %v454 = vsel %vm421, %v416, 0
      %v456 = vsel %vm421, %v418, 0
      %vm458 = vcmask 1043456
      %v460 = vsel %vm458, %v420, 0
      %462 = vmatprep.subr.mxu0 0.0
      %463 = vmatpush1.msra.mxu0 %v460
      %464 = vmatprep.subr.mxu0 0.0
      %465 = vmatpush1.msra.mxu0 0.0
      %466 = vmatprep.subr.mxu0 0.0
      %467 = vmatpush1.msra.mxu0 0.0
      %468 = vmatprep.subr.mxu0 0.0
      %469 = vmatpush1.msra.mxu0 0.0
      %470 = vmatprep.subr.mxu0 0.0
      %471 = vmatpush1.msra.mxu0 0.0
      %472 = vmatprep.subr.mxu0 0.0
      %473 = vmatpush1.msra.mxu0 0.0
      %474 = vmatprep.subr.mxu0 0.0
      %475 = vmatpush1.msra.mxu0 0.0
      %476 = vmatprep.subr.mxu0 0.0
      %477 = vmatpush1.msra.mxu0 0.0
      %478 = vmatprep.subr.mxu0 0.0
      %479 = vmatpush1.msra.mxu0 0.0
      %480 = vmatprep.subr.mxu0 0.0
      %481 = vmatpush1.msra.mxu0 0.0
      %482 = vmatprep.subr.mxu0 0.0
      %483 = vmatpush1.msra.mxu0 0.0
      %484 = vmatprep.subr.mxu0 0.0
      %485 = vmatpush1.msra.mxu0 0.0
      %486 = vmatprep.subr.mxu0 0.0
      %487 = vmatpush1.msra.mxu0 0.0
      %488 = vmatprep.subr.mxu0 0.0
      %489 = vmatpush1.msra.mxu0 0.0
      %490 = vmatprep.subr.mxu0 0.0
      %491 = vmatpush1.msra.mxu0 0.0
      %492 = vmatprep.subr.mxu0 0.0
      %493 = vmatpush1.msra.mxu0 0.0
      %494 = vmatprep.subr.mxu0 0.0
      %495 = vmatpush1.msra.mxu0 0.0
      %496 = vmatprep.subr.mxu0 0.0
      %497 = vmatpush1.msra.mxu0 0.0
      %498 = vmatprep.subr.mxu0 0.0
      %499 = vmatpush1.msra.mxu0 0.0
      %500 = vmatprep.subr.mxu0 0.0
      %501 = vmatpush1.msra.mxu0 0.0
      %502 = vmatprep.subr.mxu0 0.0
      %503 = vmatpush1.msra.mxu0 0.0
      %504 = vmatprep.subr.mxu0 0.0
      %505 = vmatpush1.msra.mxu0 0.0
      %506 = vmatprep.subr.mxu0 0.0
      %507 = vmatpush1.msra.mxu0 0.0
      %508 = vmatprep.subr.mxu0 0.0
      %509 = vmatpush1.msra.mxu0 0.0
      %510 = vmatprep.subr.mxu0 0.0
      %511 = vmatpush1.msra.mxu0 0.0
      %512 = vmatprep.subr.mxu0 0.0
      %513 = vmatpush1.msra.mxu0 0.0
      %514 = vmatprep.subr.mxu0 0.0
      %515 = vmatpush1.msra.mxu0 0.0
      %516 = vmatprep.subr.mxu0 0.0
      %517 = vmatpush1.msra.mxu0 0.0
      %518 = vmatprep.subr.mxu0 0.0
      %519 = vmatpush1.msra.mxu0 0.0
      %520 = vmatprep.subr.mxu0 0.0
      %521 = vmatpush1.msra.mxu0 0.0
      %522 = vmatprep.subr.mxu0 0.0
      %523 = vmatpush1.msra.mxu0 0.0
      %524 = vmatprep.subr.mxu0 0.0
      %525 = vmatpush1.msra.mxu0 0.0
      %526 = vmatprep.mubr.f32.mxu0 0.0
      %527 = vmatmul.mubr.f32.gmra.mrb[0].mxu0 %v422
      %v528 = vpop.f32.mrb[0].mxu0
      %v529 = vadd.f32 0.0, %v528
      %v530 = vpop.f32.mrb[0].mxu0
      %531 = vmatprep.mubr.f32.mxu0 0.0
      %532 = vmatmul.mubr.f32.gmra.mrb[0].mxu0 %v424
      %v533 = vpop.f32.mrb[0].mxu0
      %v534 = vadd.f32 0.0, %v533
      %v535 = vpop.f32.mrb[0].mxu0
      %536 = vmatprep.mubr.f32.mxu0 0.0
      %537 = vmatmul.mubr.f32.gmra.mrb[0].mxu0 %v426
      %v538 = vpop.f32.mrb[0].mxu0
      %v539 = vadd.f32 0.0, %v538
      %v540 = vpop.f32.mrb[0].mxu0
      %541 = vmatprep.mubr.f32.mxu0 0.0
      %542 = vmatmul.mubr.f32.gmra.mrb[0].mxu0 %v428
      %v543 = vpop.f32.mrb[0].mxu0
      %v544 = vadd.f32 0.0, %v543
      %v545 = vpop.f32.mrb[0].mxu0
      %546 = vmatprep.mubr.f32.mxu0 0.0
      %547 = vmatmul.mubr.f32.gmra.mrb[0].mxu0 %v430
      %v548 = vpop.f32.mrb[0].mxu0
      %v549 = vadd.f32 0.0, %v548
      %v550 = vpop.f32.mrb[0].mxu0
      %551 = vmatprep.mubr.f32.mxu0 0.0
      %552 = vmatmul.mubr.f32.gmra.mrb[0].mxu0 %v432
      %v553 = vpop.f32.mrb[0].mxu0
      %v554 = vadd.f32 0.0, %v553
      %v555 = vpop.f32.mrb[0].mxu0
      %556 = vmatprep.mubr.f32.mxu0 0.0
      %557 = vmatmul.mubr.f32.gmra.mrb[0].mxu0 %v434
      %v558 = vpop.f32.mrb[0].mxu0
      %v559 = vadd.f32 0.0, %v558
      %v560 = vpop.f32.mrb[0].mxu0
      %561 = vmatprep.mubr.f32.mxu0 0.0
      %562 = vmatmul.mubr.f32.gmra.mrb[0].mxu0 %v436
      %v563 = vpop.f32.mrb[0].mxu0
      %v564 = vadd.f32 0.0, %v563
      %v565 = vpop.f32.mrb[0].mxu0
      %566 = vmatprep.mubr.f32.mxu0 0.0
      %567 = vmatmul.mubr.f32.gmra.mrb[0].mxu0 %v438
      %v568 = vpop.f32.mrb[0].mxu0
      %v569 = vadd.f32 0.0, %v568
      %v570 = vpop.f32.mrb[0].mxu0
      %571 = vmatprep.mubr.f32.mxu0 0.0
      %572 = vmatmul.mubr.f32.gmra.mrb[0].mxu0 %v440
      %v573 = vpop.f32.mrb[0].mxu0
      %v574 = vadd.f32 0.0, %v573
      %v575 = vpop.f32.mrb[0].mxu0
      %576 = vmatprep.mubr.f32.mxu0 0.0
      %577 = vmatmul.mubr.f32.gmra.mrb[0].mxu0 %v442
      %v578 = vpop.f32.mrb[0].mxu0
      %v579 = vadd.f32 0.0, %v578
      %v580 = vpop.f32.mrb[0].mxu0
      %581 = vmatprep.mubr.f32.mxu0 0.0
      %582 = vmatmul.mubr.f32.gmra.mrb[0].mxu0 %v444
      %v583 = vpop.f32.mrb[0].mxu0
      %v584 = vadd.f32 0.0, %v583
      %v585 = vpop.f32.mrb[0].mxu0
      %586 = vmatprep.mubr.f32.mxu0 0.0
      %587 = vmatmul.mubr.f32.gmra.mrb[0].mxu0 %v446
      %v588 = vpop.f32.mrb[0].mxu0
      %v589 = vadd.f32 0.0, %v588
      %v590 = vpop.f32.mrb[0].mxu0
      %591 = vmatprep.mubr.f32.mxu0 0.0
      %592 = vmatmul.mubr.f32.gmra.mrb[0].mxu0 %v448
      %v593 = vpop.f32.mrb[0].mxu0
      %v594 = vadd.f32 0.0, %v593
      %v595 = vpop.f32.mrb[0].mxu0
      %596 = vmatprep.mubr.f32.mxu0 0.0
      %597 = vmatmul.mubr.f32.gmra.mrb[0].mxu0 %v450
      %v598 = vpop.f32.mrb[0].mxu0
      %v599 = vadd.f32 0.0, %v598
      %v600 = vpop.f32.mrb[0].mxu0
      %601 = vmatprep.mubr.f32.mxu0 0.0
      %602 = vmatmul.mubr.f32.gmra.mrb[0].mxu0 %v452
      %v603 = vpop.f32.mrb[0].mxu0
      %v604 = vadd.f32 0.0, %v603
      %v605 = vpop.f32.mrb[0].mxu0
      %606 = vmatprep.mubr.f32.mxu0 0.0
      %607 = vmatmul.mubr.f32.gmra.mrb[0].mxu0 %v454
      %v608 = vpop.f32.mrb[0].mxu0
      %v609 = vadd.f32 0.0, %v608
      %v610 = vpop.f32.mrb[0].mxu0
      %611 = vmatprep.mubr.f32.mxu0 0.0
      %612 = vmatmul.mubr.f32.gmra.mrb[0].mxu0 %v456
      %v613 = vpop.f32.mrb[0].mxu0
      %v614 = vadd.f32 0.0, %v613
      %v615 = vpop.f32.mrb[0].mxu0
      %616 = vdwg.mxu0
      %v617 = vsel %vm421, %v315, 0
      %v619 = vsel %vm421, %v316, 0
      %v621 = vsel %vm421, %v318, 0
      %v623 = vsel %vm421, %v319, 0
      %v625 = vsel %vm421, %v321, 0
      %v627 = vsel %vm421, %v322, 0
      %v629 = vsel %vm421, %v324, 0
      %v631 = vsel %vm421, %v325, 0
      %v633 = vsel %vm421, %v327, 0
      %v635 = vsel %vm421, %v328, 0
      %v637 = vsel %vm421, %v330, 0
      %v639 = vsel %vm421, %v331, 0
      %v641 = vsel %vm421, %v333, 0
      %v643 = vsel %vm421, %v334, 0
      %v645 = vsel %vm421, %v336, 0
      %v647 = vsel %vm421, %v337, 0
      %v649 = vsel %vm421, %v339, 0
      %v651 = vsel %vm421, %v340, 0
      %v654 = vsel %vm458, %v345, 0
      %656 = vmatprep.subr.mxu0 0.0
      %657 = vmatpush1.msra.mxu0 %v654
      %658 = vmatprep.subr.mxu0 0.0
      %659 = vmatpush1.msra.mxu0 0.0
      %660 = vmatprep.subr.mxu0 0.0
      %661 = vmatpush1.msra.mxu0 0.0
      %662 = vmatprep.subr.mxu0 0.0
      %663 = vmatpush1.msra.mxu0 0.0
      %664 = vmatprep.subr.mxu0 0.0
      %665 = vmatpush1.msra.mxu0 0.0
      %666 = vmatprep.subr.mxu0 0.0
      %667 = vmatpush1.msra.mxu0 0.0
      %668 = vmatprep.subr.mxu0 0.0
      %669 = vmatpush1.msra.mxu0 0.0
      %670 = vmatprep.subr.mxu0 0.0
      %671 = vmatpush1.msra.mxu0 0.0
      %672 = vmatprep.subr.mxu0 0.0
      %673 = vmatpush1.msra.mxu0 0.0
      %674 = vmatprep.subr.mxu0 0.0
      %675 = vmatpush1.msra.mxu0 0.0
      %676 = vmatprep.subr.mxu0 0.0
      %677 = vmatpush1.msra.mxu0 0.0
      %678 = vmatprep.subr.mxu0 0.0
      %679 = vmatpush1.msra.mxu0 0.0
      %680 = vmatprep.subr.mxu0 0.0
      %681 = vmatpush1.msra.mxu0 0.0
      %682 = vmatprep.subr.mxu0 0.0
      %683 = vmatpush1.msra.mxu0 0.0
      %684 = vmatprep.subr.mxu0 0.0
      %685 = vmatpush1.msra.mxu0 0.0
      %686 = vmatprep.subr.mxu0 0.0
      %687 = vmatpush1.msra.mxu0 0.0
      %688 = vmatprep.subr.mxu0 0.0
      %689 = vmatpush1.msra.mxu0 0.0
      %690 = vmatprep.subr.mxu0 0.0
      %691 = vmatpush1.msra.mxu0 0.0
      %692 = vmatprep.subr.mxu0 0.0
      %693 = vmatpush1.msra.mxu0 0.0
      %694 = vmatprep.subr.mxu0 0.0
      %695 = vmatpush1.msra.mxu0 0.0
      %696 = vmatprep.subr.mxu0 0.0
      %697 = vmatpush1.msra.mxu0 0.0
      %698 = vmatprep.subr.mxu0 0.0
      %699 = vmatpush1.msra.mxu0 0.0
      %700 = vmatprep.subr.mxu0 0.0
      %701 = vmatpush1.msra.mxu0 0.0
      %702 = vmatprep.subr.mxu0 0.0
      %703 = vmatpush1.msra.mxu0 0.0
      %704 = vmatprep.subr.mxu0 0.0
      %705 = vmatpush1.msra.mxu0 0.0
      %706 = vmatprep.subr.mxu0 0.0
      %707 = vmatpush1.msra.mxu0 0.0
      %708 = vmatprep.subr.mxu0 0.0
      %709 = vmatpush1.msra.mxu0 0.0
      %710 = vmatprep.subr.mxu0 0.0
      %711 = vmatpush1.msra.mxu0 0.0
      %712 = vmatprep.subr.mxu0 0.0
      %713 = vmatpush1.msra.mxu0 0.0
      %714 = vmatprep.subr.mxu0 0.0
      %715 = vmatpush1.msra.mxu0 0.0
      %716 = vmatprep.subr.mxu0 0.0
      %717 = vmatpush1.msra.mxu0 0.0
      %718 = vmatprep.subr.mxu0 0.0
      %719 = vmatpush1.msra.mxu0 0.0
      %720 = vmatprep.mubr.f32.mxu0 0.0
      %721 = vmatmul.mubr.f32.gmra.mrb[0].mxu0 %v617
      %v722 = vpop.f32.mrb[0].mxu0
      %v723 = vadd.f32 %v529, %v722
      %v724 = vpop.f32.mrb[0].mxu0
      %725 = vmatprep.mubr.f32.mxu0 0.0
      %726 = vmatmul.mubr.f32.gmra.mrb[0].mxu0 %v619
      %v727 = vpop.f32.mrb[0].mxu0
      %v728 = vadd.f32 %v534, %v727
      %v729 = vpop.f32.mrb[0].mxu0
      %730 = vmatprep.mubr.f32.mxu0 0.0
      %731 = vmatmul.mubr.f32.gmra.mrb[0].mxu0 %v621
      %v732 = vpop.f32.mrb[0].mxu0
      %v733 = vadd.f32 %v539, %v732
      %v734 = vpop.f32.mrb[0].mxu0
      %735 = vmatprep.mubr.f32.mxu0 0.0
      %736 = vmatmul.mubr.f32.gmra.mrb[0].mxu0 %v623
      %v737 = vpop.f32.mrb[0].mxu0
      %v738 = vadd.f32 %v544, %v737
      %v739 = vpop.f32.mrb[0].mxu0
      %740 = vmatprep.mubr.f32.mxu0 0.0
      %741 = vmatmul.mubr.f32.gmra.mrb[0].mxu0 %v625
      %v742 = vpop.f32.mrb[0].mxu0
      %v743 = vadd.f32 %v549, %v742
      %v744 = vpop.f32.mrb[0].mxu0
      %745 = vmatprep.mubr.f32.mxu0 0.0
      %746 = vmatmul.mubr.f32.gmra.mrb[0].mxu0 %v627
      %v747 = vpop.f32.mrb[0].mxu0
      %v748 = vadd.f32 %v554, %v747
      %v749 = vpop.f32.mrb[0].mxu0
      %750 = vmatprep.mubr.f32.mxu0 0.0
      %751 = vmatmul.mubr.f32.gmra.mrb[0].mxu0 %v629
      %v752 = vpop.f32.mrb[0].mxu0
      %v753 = vadd.f32 %v559, %v752
      %v754 = vpop.f32.mrb[0].mxu0
      %755 = vmatprep.mubr.f32.mxu0 0.0
      %756 = vmatmul.mubr.f32.gmra.mrb[0].mxu0 %v631
      %v757 = vpop.f32.mrb[0].mxu0
      %v758 = vadd.f32 %v564, %v757
      %v759 = vpop.f32.mrb[0].mxu0
      %760 = vmatprep.mubr.f32.mxu0 0.0
      %761 = vmatmul.mubr.f32.gmra.mrb[0].mxu0 %v633
      %v762 = vpop.f32.mrb[0].mxu0
      %v763 = vadd.f32 %v569, %v762
      %v764 = vpop.f32.mrb[0].mxu0
      %765 = vmatprep.mubr.f32.mxu0 0.0
      %766 = vmatmul.mubr.f32.gmra.mrb[0].mxu0 %v635
      %v767 = vpop.f32.mrb[0].mxu0
      %v768 = vadd.f32 %v574, %v767
      %v769 = vpop.f32.mrb[0].mxu0
      %770 = vmatprep.mubr.f32.mxu0 0.0
      %771 = vmatmul.mubr.f32.gmra.mrb[0].mxu0 %v637
      %v772 = vpop.f32.mrb[0].mxu0
      %v773 = vadd.f32 %v579, %v772
      %v774 = vpop.f32.mrb[0].mxu0
      %775 = vmatprep.mubr.f32.mxu0 0.0
      %776 = vmatmul.mubr.f32.gmra.mrb[0].mxu0 %v639
      %v777 = vpop.f32.mrb[0].mxu0
      %v778 = vadd.f32 %v584, %v777
      %v779 = vpop.f32.mrb[0].mxu0
      %780 = vmatprep.mubr.f32.mxu0 0.0
      %781 = vmatmul.mubr.f32.gmra.mrb[0].mxu0 %v641
      %v782 = vpop.f32.mrb[0].mxu0
      %v783 = vadd.f32 %v589, %v782
      %v784 = vpop.f32.mrb[0].mxu0
      %785 = vmatprep.mubr.f32.mxu0 0.0
      %786 = vmatmul.mubr.f32.gmra.mrb[0].mxu0 %v643
      %v787 = vpop.f32.mrb[0].mxu0
      %v788 = vadd.f32 %v594, %v787
      %v789 = vpop.f32.mrb[0].mxu0
      %790 = vmatprep.mubr.f32.mxu0 0.0
      %791 = vmatmul.mubr.f32.gmra.mrb[0].mxu0 %v645
      %v792 = vpop.f32.mrb[0].mxu0
      %v793 = vadd.f32 %v599, %v792
      %v794 = vpop.f32.mrb[0].mxu0
      %795 = vmatprep.mubr.f32.mxu0 0.0
      %796 = vmatmul.mubr.f32.gmra.mrb[0].mxu0 %v647
      %v797 = vpop.f32.mrb[0].mxu0
      %v798 = vadd.f32 %v604, %v797
      %v799 = vpop.f32.mrb[0].mxu0
      %800 = vmatprep.mubr.f32.mxu0 0.0
      %801 = vmatmul.mubr.f32.gmra.mrb[0].mxu0 %v649
      %v802 = vpop.f32.mrb[0].mxu0
      %v803 = vadd.f32 %v609, %v802
      %v804 = vpop.f32.mrb[0].mxu0
      %805 = vmatprep.mubr.f32.mxu0 0.0
      %806 = vmatmul.mubr.f32.gmra.mrb[0].mxu0 %v651
      %v807 = vpop.f32.mrb[0].mxu0
      %v808 = vadd.f32 %v614, %v807
      %v809 = vpop.f32.mrb[0].mxu0
      %810 = vdwg.mxu0
      %s811 = scalar_lea.vmem %s0, 8
      %v812 = vld [vmem:[%s811] sm:$0xf]
      %v814 = vsel %vm421, %v342, 0
      %v817 = vsel %vm421, %v343, 0
      %v820 = vsel %vm458, %v812, 0
      %822 = vmatprep.subr.mxu0 0.0
      %823 = vmatpush1.msra.mxu0 %v820
      %824 = vmatprep.subr.mxu0 0.0
      %825 = vmatpush1.msra.mxu0 0.0
      %826 = vmatprep.subr.mxu0 0.0
      %827 = vmatpush1.msra.mxu0 0.0
      %828 = vmatprep.subr.mxu0 0.0
      %829 = vmatpush1.msra.mxu0 0.0
      %830 = vmatprep.subr.mxu0 0.0
      %831 = vmatpush1.msra.mxu0 0.0
      %832 = vmatprep.subr.mxu0 0.0
      %833 = vmatpush1.msra.mxu0 0.0
      %834 = vmatprep.subr.mxu0 0.0
      %835 = vmatpush1.msra.mxu0 0.0
      %836 = vmatprep.subr.mxu0 0.0
      %837 = vmatpush1.msra.mxu0 0.0
      %838 = vmatprep.subr.mxu0 0.0
      %839 = vmatpush1.msra.mxu0 0.0
      %840 = vmatprep.subr.mxu0 0.0
      %841 = vmatpush1.msra.mxu0 0.0
      %842 = vmatprep.subr.mxu0 0.0
      %843 = vmatpush1.msra.mxu0 0.0
      %844 = vmatprep.subr.mxu0 0.0
      %845 = vmatpush1.msra.mxu0 0.0
      %846 = vmatprep.subr.mxu0 0.0
      %847 = vmatpush1.msra.mxu0 0.0
      %848 = vmatprep.subr.mxu0 0.0
      %849 = vmatpush1.msra.mxu0 0.0
      %850 = vmatprep.subr.mxu0 0.0
      %851 = vmatpush1.msra.mxu0 0.0
      %852 = vmatprep.subr.mxu0 0.0
      %853 = vmatpush1.msra.mxu0 0.0
      %854 = vmatprep.subr.mxu0 0.0
      %855 = vmatpush1.msra.mxu0 0.0
      %856 = vmatprep.subr.mxu0 0.0
      %857 = vmatpush1.msra.mxu0 0.0
      %858 = vmatprep.subr.mxu0 0.0
      %859 = vmatpush1.msra.mxu0 0.0
      %860 = vmatprep.subr.mxu0 0.0
      %861 = vmatpush1.msra.mxu0 0.0
      %862 = vmatprep.subr.mxu0 0.0
      %863 = vmatpush1.msra.mxu0 0.0
      %864 = vmatprep.subr.mxu0 0.0
      %865 = vmatpush1.msra.mxu0 0.0
      %866 = vmatprep.subr.mxu0 0.0
      %867 = vmatpush1.msra.mxu0 0.0
      %868 = vmatprep.subr.mxu0 0.0
      %869 = vmatpush1.msra.mxu0 0.0
      %870 = vmatprep.subr.mxu0 0.0
      %871 = vmatpush1.msra.mxu0 0.0
      %872 = vmatprep.subr.mxu0 0.0
      %873 = vmatpush1.msra.mxu0 0.0
      %874 = vmatprep.subr.mxu0 0.0
      %875 = vmatpush1.msra.mxu0 0.0
      %876 = vmatprep.subr.mxu0 0.0
      %877 = vmatpush1.msra.mxu0 0.0
      %878 = vmatprep.subr.mxu0 0.0
      %879 = vmatpush1.msra.mxu0 0.0
      %880 = vmatprep.subr.mxu0 0.0
      %881 = vmatpush1.msra.mxu0 0.0
      %882 = vmatprep.subr.mxu0 0.0
      %883 = vmatpush1.msra.mxu0 0.0
      %884 = vmatprep.subr.mxu0 0.0
      %885 = vmatpush1.msra.mxu0 0.0
      %886 = vmatprep.mubr.f32.mxu0 0.0
      %887 = vmatmul.mubr.f32.gmra.mrb[0].mxu0 %v621
      %v888 = vpop.f32.mrb[0].mxu0
      %v889 = vadd.f32 0.0, %v888
      %v890 = vpop.f32.mrb[0].mxu0
      %891 = vmatprep.mubr.f32.mxu0 0.0
      %892 = vmatmul.mubr.f32.gmra.mrb[0].mxu0 %v623
      %v893 = vpop.f32.mrb[0].mxu0
      %v894 = vadd.f32 0.0, %v893
      %v895 = vpop.f32.mrb[0].mxu0
      %896 = vmatprep.mubr.f32.mxu0 0.0
      %897 = vmatmul.mubr.f32.gmra.mrb[0].mxu0 %v625
      %v898 = vpop.f32.mrb[0].mxu0
      %v899 = vadd.f32 0.0, %v898
      %v900 = vpop.f32.mrb[0].mxu0
      %901 = vmatprep.mubr.f32.mxu0 0.0
      %902 = vmatmul.mubr.f32.gmra.mrb[0].mxu0 %v627
      %v903 = vpop.f32.mrb[0].mxu0
      %v904 = vadd.f32 0.0, %v903
      %v905 = vpop.f32.mrb[0].mxu0
      %906 = vmatprep.mubr.f32.mxu0 0.0
      %907 = vmatmul.mubr.f32.gmra.mrb[0].mxu0 %v629
      %v908 = vpop.f32.mrb[0].mxu0
      %v909 = vadd.f32 0.0, %v908
      %v910 = vpop.f32.mrb[0].mxu0
      %911 = vmatprep.mubr.f32.mxu0 0.0
      %912 = vmatmul.mubr.f32.gmra.mrb[0].mxu0 %v631
      %v913 = vpop.f32.mrb[0].mxu0
      %v914 = vadd.f32 0.0, %v913
      %v915 = vpop.f32.mrb[0].mxu0
      %916 = vmatprep.mubr.f32.mxu0 0.0
      %917 = vmatmul.mubr.f32.gmra.mrb[0].mxu0 %v633
      %v918 = vpop.f32.mrb[0].mxu0
      %v919 = vadd.f32 0.0, %v918
      %v920 = vpop.f32.mrb[0].mxu0
      %921 = vmatprep.mubr.f32.mxu0 0.0
      %922 = vmatmul.mubr.f32.gmra.mrb[0].mxu0 %v635
      %v923 = vpop.f32.mrb[0].mxu0
      %v924 = vadd.f32 0.0, %v923
      %v925 = vpop.f32.mrb[0].mxu0
      %926 = vmatprep.mubr.f32.mxu0 0.0
      %927 = vmatmul.mubr.f32.gmra.mrb[0].mxu0 %v637
      %v928 = vpop.f32.mrb[0].mxu0
      %v929 = vadd.f32 0.0, %v928
      %v930 = vpop.f32.mrb[0].mxu0
      %931 = vmatprep.mubr.f32.mxu0 0.0
      %932 = vmatmul.mubr.f32.gmra.mrb[0].mxu0 %v639
      %v933 = vpop.f32.mrb[0].mxu0
      %v934 = vadd.f32 0.0, %v933
      %v935 = vpop.f32.mrb[0].mxu0
      %936 = vmatprep.mubr.f32.mxu0 0.0
      %937 = vmatmul.mubr.f32.gmra.mrb[0].mxu0 %v641
      %v938 = vpop.f32.mrb[0].mxu0
      %v939 = vadd.f32 0.0, %v938
      %v940 = vpop.f32.mrb[0].mxu0
      %941 = vmatprep.mubr.f32.mxu0 0.0
      %942 = vmatmul.mubr.f32.gmra.mrb[0].mxu0 %v643
      %v943 = vpop.f32.mrb[0].mxu0
      %v944 = vadd.f32 0.0, %v943
      %v945 = vpop.f32.mrb[0].mxu0
      %946 = vmatprep.mubr.f32.mxu0 0.0
      %947 = vmatmul.mubr.f32.gmra.mrb[0].mxu0 %v645
      %v948 = vpop.f32.mrb[0].mxu0
      %v949 = vadd.f32 0.0, %v948
      %v950 = vpop.f32.mrb[0].mxu0
      %951 = vmatprep.mubr.f32.mxu0 0.0
      %952 = vmatmul.mubr.f32.gmra.mrb[0].mxu0 %v647
      %v953 = vpop.f32.mrb[0].mxu0
      %v954 = vadd.f32 0.0, %v953
      %v955 = vpop.f32.mrb[0].mxu0
      %956 = vmatprep.mubr.f32.mxu0 0.0
      %957 = vmatmul.mubr.f32.gmra.mrb[0].mxu0 %v649
      %v958 = vpop.f32.mrb[0].mxu0
      %v959 = vadd.f32 0.0, %v958
      %v960 = vpop.f32.mrb[0].mxu0
      %961 = vmatprep.mubr.f32.mxu0 0.0
      %962 = vmatmul.mubr.f32.gmra.mrb[0].mxu0 %v651
      %v963 = vpop.f32.mrb[0].mxu0
      %v964 = vadd.f32 0.0, %v963
      %v965 = vpop.f32.mrb[0].mxu0
      %966 = vmatprep.mubr.f32.mxu0 0.0
      %967 = vmatmul.mubr.f32.gmra.mrb[0].mxu0 %v814
      %v968 = vpop.f32.mrb[0].mxu0
      %v969 = vadd.f32 0.0, %v968
      %v970 = vpop.f32.mrb[0].mxu0
      %971 = vmatprep.mubr.f32.mxu0 0.0
      %972 = vmatmul.mubr.f32.gmra.mrb[0].mxu0 %v817
      %v973 = vpop.f32.mrb[0].mxu0
      %v974 = vadd.f32 0.0, %v973
      %v975 = vpop.f32.mrb[0].mxu0
      %976 = vdwg.mxu0
      %v977 = vadd.f32 %v723, %v889
      %v978 = vadd.f32 %v728, %v894
      %v979 = vadd.f32 %v733, %v899
      %v980 = vadd.f32 %v738, %v904
      %v981 = vadd.f32 %v743, %v909
      %v982 = vadd.f32 %v748, %v914
      %v983 = vadd.f32 %v753, %v919
      %v984 = vadd.f32 %v758, %v924
      %v985 = vadd.f32 %v763, %v929
      %v986 = vadd.f32 %v768, %v934
      %v987 = vadd.f32 %v773, %v939
      %v988 = vadd.f32 %v778, %v944
      %v989 = vadd.f32 %v783, %v949
      %v990 = vadd.f32 %v788, %v954
      %v991 = vadd.f32 %v793, %v959
      %v992 = vadd.f32 %v798, %v964
      %v993 = vadd.f32 %v803, %v969
      %v994 = vadd.f32 %v808, %v974
      %v996 = vrot.slane %v342, 1
      %v997 = vrot.slane %v343, 1
      %v998 = vsel %vm373, %v996, %v997
      %v999 = vrot.slane %v344, 1
      %v1000 = vsel %vm373, %v997, %v999
      %s1001 = scalar_lea.vmem %s0, 12
      %v1002 = vld [vmem:[%s1001] sm:$0xf]
      %v1003 = vsel %vm421, %v998, 0
      %v1005 = vsel %vm421, %v1000, 0
      %v1008 = vsel %vm458, %v1002, 0
      %1010 = vmatprep.subr.mxu0 0.0
      %1011 = vmatpush1.msra.mxu0 %v1008
      %1012 = vmatprep.subr.mxu0 0.0
      %1013 = vmatpush1.msra.mxu0 0.0
      %1014 = vmatprep.subr.mxu0 0.0
      %1015 = vmatpush1.msra.mxu0 0.0
      %1016 = vmatprep.subr.mxu0 0.0
      %1017 = vmatpush1.msra.mxu0 0.0
      %1018 = vmatprep.subr.mxu0 0.0
      %1019 = vmatpush1.msra.mxu0 0.0
      %1020 = vmatprep.subr.mxu0 0.0
      %1021 = vmatpush1.msra.mxu0 0.0
      %1022 = vmatprep.subr.mxu0 0.0
      %1023 = vmatpush1.msra.mxu0 0.0
      %1024 = vmatprep.subr.mxu0 0.0
      %1025 = vmatpush1.msra.mxu0 0.0
      %1026 = vmatprep.subr.mxu0 0.0
      %1027 = vmatpush1.msra.mxu0 0.0
      %1028 = vmatprep.subr.mxu0 0.0
      %1029 = vmatpush1.msra.mxu0 0.0
      %1030 = vmatprep.subr.mxu0 0.0
      %1031 = vmatpush1.msra.mxu0 0.0
      %1032 = vmatprep.subr.mxu0 0.0
      %1033 = vmatpush1.msra.mxu0 0.0
      %1034 = vmatprep.subr.mxu0 0.0
      %1035 = vmatpush1.msra.mxu0 0.0
      %1036 = vmatprep.subr.mxu0 0.0
      %1037 = vmatpush1.msra.mxu0 0.0
      %1038 = vmatprep.subr.mxu0 0.0
      %1039 = vmatpush1.msra.mxu0 0.0
      %1040 = vmatprep.subr.mxu0 0.0
      %1041 = vmatpush1.msra.mxu0 0.0
      %1042 = vmatprep.subr.mxu0 0.0
      %1043 = vmatpush1.msra.mxu0 0.0
      %1044 = vmatprep.subr.mxu0 0.0
      %1045 = vmatpush1.msra.mxu0 0.0
      %1046 = vmatprep.subr.mxu0 0.0
      %1047 = vmatpush1.msra.mxu0 0.0
      %1048 = vmatprep.subr.mxu0 0.0
      %1049 = vmatpush1.msra.mxu0 0.0
      %1050 = vmatprep.subr.mxu0 0.0
      %1051 = vmatpush1.msra.mxu0 0.0
      %1052 = vmatprep.subr.mxu0 0.0
      %1053 = vmatpush1.msra.mxu0 0.0
      %1054 = vmatprep.subr.mxu0 0.0
      %1055 = vmatpush1.msra.mxu0 0.0
      %1056 = vmatprep.subr.mxu0 0.0
      %1057 = vmatpush1.msra.mxu0 0.0
      %1058 = vmatprep.subr.mxu0 0.0
      %1059 = vmatpush1.msra.mxu0 0.0
      %1060 = vmatprep.subr.mxu0 0.0
      %1061 = vmatpush1.msra.mxu0 0.0
      %1062 = vmatprep.subr.mxu0 0.0
      %1063 = vmatpush1.msra.mxu0 0.0
      %1064 = vmatprep.subr.mxu0 0.0
      %1065 = vmatpush1.msra.mxu0 0.0
      %1066 = vmatprep.subr.mxu0 0.0
      %1067 = vmatpush1.msra.mxu0 0.0
      %1068 = vmatprep.subr.mxu0 0.0
      %1069 = vmatpush1.msra.mxu0 0.0
      %1070 = vmatprep.subr.mxu0 0.0
      %1071 = vmatpush1.msra.mxu0 0.0
      %1072 = vmatprep.subr.mxu0 0.0
      %1073 = vmatpush1.msra.mxu0 0.0
      %1074 = vmatprep.mubr.f32.mxu0 0.0
      %1075 = vmatmul.mubr.f32.gmra.mrb[0].mxu0 %v426
      %v1076 = vpop.f32.mrb[0].mxu0
      %v1077 = vadd.f32 0.0, %v1076
      %v1078 = vpop.f32.mrb[0].mxu0
      %1079 = vmatprep.mubr.f32.mxu0 0.0
      %1080 = vmatmul.mubr.f32.gmra.mrb[0].mxu0 %v428
      %v1081 = vpop.f32.mrb[0].mxu0
      %v1082 = vadd.f32 0.0, %v1081
      %v1083 = vpop.f32.mrb[0].mxu0
      %1084 = vmatprep.mubr.f32.mxu0 0.0
      %1085 = vmatmul.mubr.f32.gmra.mrb[0].mxu0 %v430
      %v1086 = vpop.f32.mrb[0].mxu0
      %v1087 = vadd.f32 0.0, %v1086
      %v1088 = vpop.f32.mrb[0].mxu0
      %1089 = vmatprep.mubr.f32.mxu0 0.0
      %1090 = vmatmul.mubr.f32.gmra.mrb[0].mxu0 %v432
      %v1091 = vpop.f32.mrb[0].mxu0
      %v1092 = vadd.f32 0.0, %v1091
      %v1093 = vpop.f32.mrb[0].mxu0
      %1094 = vmatprep.mubr.f32.mxu0 0.0
      %1095 = vmatmul.mubr.f32.gmra.mrb[0].mxu0 %v434
      %v1096 = vpop.f32.mrb[0].mxu0
      %v1097 = vadd.f32 0.0, %v1096
      %v1098 = vpop.f32.mrb[0].mxu0
      %1099 = vmatprep.mubr.f32.mxu0 0.0
      %1100 = vmatmul.mubr.f32.gmra.mrb[0].mxu0 %v436
      %v1101 = vpop.f32.mrb[0].mxu0
      %v1102 = vadd.f32 0.0, %v1101
      %v1103 = vpop.f32.mrb[0].mxu0
      %1104 = vmatprep.mubr.f32.mxu0 0.0
      %1105 = vmatmul.mubr.f32.gmra.mrb[0].mxu0 %v438
      %v1106 = vpop.f32.mrb[0].mxu0
      %v1107 = vadd.f32 0.0, %v1106
      %v1108 = vpop.f32.mrb[0].mxu0
      %1109 = vmatprep.mubr.f32.mxu0 0.0
      %1110 = vmatmul.mubr.f32.gmra.mrb[0].mxu0 %v440
      %v1111 = vpop.f32.mrb[0].mxu0
      %v1112 = vadd.f32 0.0, %v1111
      %v1113 = vpop.f32.mrb[0].mxu0
      %1114 = vmatprep.mubr.f32.mxu0 0.0
      %1115 = vmatmul.mubr.f32.gmra.mrb[0].mxu0 %v442
      %v1116 = vpop.f32.mrb[0].mxu0
      %v1117 = vadd.f32 0.0, %v1116
      %v1118 = vpop.f32.mrb[0].mxu0
      %1119 = vmatprep.mubr.f32.mxu0 0.0
      %1120 = vmatmul.mubr.f32.gmra.mrb[0].mxu0 %v444
      %v1121 = vpop.f32.mrb[0].mxu0
      %v1122 = vadd.f32 0.0, %v1121
      %v1123 = vpop.f32.mrb[0].mxu0
      %1124 = vmatprep.mubr.f32.mxu0 0.0
      %1125 = vmatmul.mubr.f32.gmra.mrb[0].mxu0 %v446
      %v1126 = vpop.f32.mrb[0].mxu0
      %v1127 = vadd.f32 0.0, %v1126
      %v1128 = vpop.f32.mrb[0].mxu0
      %1129 = vmatprep.mubr.f32.mxu0 0.0
      %1130 = vmatmul.mubr.f32.gmra.mrb[0].mxu0 %v448
      %v1131 = vpop.f32.mrb[0].mxu0
      %v1132 = vadd.f32 0.0, %v1131
      %v1133 = vpop.f32.mrb[0].mxu0
      %1134 = vmatprep.mubr.f32.mxu0 0.0
      %1135 = vmatmul.mubr.f32.gmra.mrb[0].mxu0 %v450
      %v1136 = vpop.f32.mrb[0].mxu0
      %v1137 = vadd.f32 0.0, %v1136
      %v1138 = vpop.f32.mrb[0].mxu0
      %1139 = vmatprep.mubr.f32.mxu0 0.0
      %1140 = vmatmul.mubr.f32.gmra.mrb[0].mxu0 %v452
      %v1141 = vpop.f32.mrb[0].mxu0
      %v1142 = vadd.f32 0.0, %v1141
      %v1143 = vpop.f32.mrb[0].mxu0
      %1144 = vmatprep.mubr.f32.mxu0 0.0
      %1145 = vmatmul.mubr.f32.gmra.mrb[0].mxu0 %v454
      %v1146 = vpop.f32.mrb[0].mxu0
      %v1147 = vadd.f32 0.0, %v1146
      %v1148 = vpop.f32.mrb[0].mxu0
      %1149 = vmatprep.mubr.f32.mxu0 0.0
      %1150 = vmatmul.mubr.f32.gmra.mrb[0].mxu0 %v456
      %v1151 = vpop.f32.mrb[0].mxu0
      %v1152 = vadd.f32 0.0, %v1151
      %v1153 = vpop.f32.mrb[0].mxu0
      %1154 = vmatprep.mubr.f32.mxu0 0.0
      %1155 = vmatmul.mubr.f32.gmra.mrb[0].mxu0 %v1003
      %v1156 = vpop.f32.mrb[0].mxu0
      %v1157 = vadd.f32 0.0, %v1156
      %v1158 = vpop.f32.mrb[0].mxu0
      %1159 = vmatprep.mubr.f32.mxu0 0.0
      %1160 = vmatmul.mubr.f32.gmra.mrb[0].mxu0 %v1005
      %v1161 = vpop.f32.mrb[0].mxu0
      %v1162 = vadd.f32 0.0, %v1161
      %v1163 = vpop.f32.mrb[0].mxu0
      %1164 = vdwg.mxu0
      %v1165 = vadd.f32 %v977, %v1077
      %v1166 = vadd.f32 %v978, %v1082
      %v1167 = vadd.f32 %v979, %v1087
      %v1168 = vadd.f32 %v980, %v1092
      %v1169 = vadd.f32 %v981, %v1097
      %v1170 = vadd.f32 %v982, %v1102
      %v1171 = vadd.f32 %v983, %v1107
      %v1172 = vadd.f32 %v984, %v1112
      %v1173 = vadd.f32 %v985, %v1117
      %v1174 = vadd.f32 %v986, %v1122
      %v1175 = vadd.f32 %v987, %v1127
      %v1176 = vadd.f32 %v988, %v1132
      %v1177 = vadd.f32 %v989, %v1137
      %v1178 = vadd.f32 %v990, %v1142
      %v1179 = vadd.f32 %v991, %v1147
      %v1180 = vadd.f32 %v992, %v1152
      %v1181 = vadd.f32 %v993, %v1157
      %v1182 = vadd.f32 %v994, %v1162
      %v1183 = vld [vmem:[%s1] sm:$0x1]
      %v1185 = vlaneseq
      %v1186 = vshrl.u32 %v1185, 7
      %v1187 = vsub.s32 0, %v1186
      %v1188 = vrot.slane %v1183, %v1187
      %v1190 = vadd.f32 %v1165, %v1188
      %v1191 = vadd.f32 %v1166, %v1188
      %v1192 = vadd.f32 %v1167, %v1188
      %v1193 = vadd.f32 %v1168, %v1188
      %v1194 = vadd.f32 %v1169, %v1188
      %v1195 = vadd.f32 %v1170, %v1188
      %v1196 = vadd.f32 %v1171, %v1188
      %v1197 = vadd.f32 %v1172, %v1188
      %v1198 = vadd.f32 %v1173, %v1188
      %v1199 = vadd.f32 %v1174, %v1188
      %v1200 = vadd.f32 %v1175, %v1188
      %v1201 = vadd.f32 %v1176, %v1188
      %v1202 = vadd.f32 %v1177, %v1188
      %v1203 = vadd.f32 %v1178, %v1188
      %v1204 = vadd.f32 %v1179, %v1188
      %v1205 = vadd.f32 %v1180, %v1188
      %v1206 = vadd.f32 %v1181, %v1188
      %v1207 = vadd.f32 %v1182, %v1188
      %1208 = vst [vmem:[%s313] sm:$0xff] %v1190
      %1209 = vst [vmem:[%s313 + $0x8] sm:$0xff] %v1191
      %1210 = vst [vmem:[%s313 + $0x10] sm:$0xff] %v1192
      %1211 = vst [vmem:[%s313 + $0x18] sm:$0xff] %v1193
      %1212 = vst [vmem:[%s313 + $0x20] sm:$0xff] %v1194
      %1213 = vst [vmem:[%s313 + $0x28] sm:$0xff] %v1195
      %1214 = vst [vmem:[%s313 + $0x30] sm:$0xff] %v1196
      %1215 = vst [vmem:[%s313 + $0x38] sm:$0xff] %v1197
      %1216 = vst [vmem:[%s313 + $0x40] sm:$0xff] %v1198
      %1217 = vst [vmem:[%s313 + $0x48] sm:$0xff] %v1199
      %1218 = vst [vmem:[%s313 + $0x50] sm:$0xff] %v1200
      %1219 = vst [vmem:[%s313 + $0x58] sm:$0xff] %v1201
      %1220 = vst [vmem:[%s313 + $0x60] sm:$0xff] %v1202
      %1221 = vst [vmem:[%s313 + $0x68] sm:$0xff] %v1203
      %1222 = vst [vmem:[%s313 + $0x70] sm:$0xff] %v1204
      %1223 = vst [vmem:[%s313 + $0x78] sm:$0xff] %v1205
      %1224 = vst [vmem:[%s313 + $0x80] sm:$0xff] %v1206
      %1225 = vst [vmem:[%s313 + $0x88] sm:$0xff] %v1207
      %s1226 = smul.u32 9, %s20
      %p1227 = scmp.lt.s32.totalorder %s19, 1
      %s1228 = scalar_select %p1227, %s19, 1
      %p1229 = scmp.lt.s32.totalorder %s1226, 8
      %s1230 = scalar_select %p1229, %s1226, 8
      %s1231 = smul.addr %s1230, 2
      %s1232 = smul.addr %s1228, 18
      %s1233 = sadd.s32 %s1231, %s1232
      %s1234 = smul.addr %s1233, 8
      %s1235 = scalar_lea.vmem %s4, %s1234
      // Predicated region
      $region37: #{transition_up.1} parent=35 // pred_check
        %p1236 = pneg %p149
      $region38: #{transition_up.1} parent=35 // pred_check_branch
        %1238 = sbr.rel (%p1236) target = $region40
      $region39: #{transition_up.1} parent=35 // pred_region
        %s1239 = smul.u32 9, %s20
      $region40: #{transition_up.1} parent=35 // pred_fallthru
        _
    $region36: #{transition_up.1} parent=5 // pred_fallthru
      _
    %p1240 = scmp.le.s32.totalorder 2, %s10
    // Predicated region
    $region41: #{transition_up.1} parent=5 // pred_check
      %p1241 = pneg %p1240
    $region42: #{transition_up.1} parent=5 // pred_check_branch
      %1243 = sbr.rel (%p1241) target = $region44
    $region43: #{transition_up.1} parent=5 // pred_region
      %s1244 = ssub.s32 %s10, 2
      // Predicated region
      $region45: #{transition_up.1} parent=43 // pred_check
        %p1245 = pneg %p155
      $region46: #{transition_up.1} parent=43 // pred_check_branch
        %1247 = sbr.rel (%p1245) target = $region48
      $region47: #{transition_up.1} parent=43 // pred_region
        %s1248 = smul.u32 9, %s22
        %p1249 = scmp.lt.s32.totalorder %s21, 1
        %s1250 = scalar_select %p1249, %s21, 1
        %p1251 = scmp.lt.s32.totalorder %s1248, 8
        %s1252 = scalar_select %p1251, %s1248, 8
        %s1253 = smul.addr %s1252, 2
        %s1254 = smul.addr %s1250, 18
        %s1255 = sadd.s32 %s1253, %s1254
        %s1256 = smul.addr %s1255, 8
        %s1257 = scalar_lea.vmem %s4, %s1256
      $region48: #{transition_up.1} parent=43 // pred_fallthru
        _
    $region44: #{transition_up.1} parent=5 // pred_fallthru
      _
  $region6: #{transition_up.1} parent=0 // loop_footer
    %s14 = sadd.s32 1, %s10
  $region7: #{transition_up.1} parent=0 // loop_footer_branch
    %9 = sbr.rel target = $region3
  $region8: #{transition_up.1} parent=0 // loop_exit
    _

</llo_original>
